<compile_context>
chip_gen: v5e
topology: v5e:2x2
jax: 0.10.0
libtpu: 0.0.40
codegen_flags: <defaults>
</compile_context>

<pallas_src>
import jax
import jax.numpy as jnp
from jax.experimental import pallas as pl
from jax.experimental.pallas import tpu as pltpu


def conv_bias_relu_kernel(x_ref, t_ref, o_ref):
    # x_ref: (Mp, Kp)   im2col rows (batch folded into M), bias lane = 1.0
    # t_ref: (Kp, No)   stacked row-Toeplitz weights + bias row, K zero-padded
    # o_ref: (Mp, No)   lane-dense output rows
    acc = jnp.dot(x_ref[...], t_ref[...], preferred_element_type=jnp.float32)
    o_ref[...] = jnp.maximum(acc, 0.0).astype(o_ref.dtype)


def _round_up(x, m):
    return ((x + m - 1) // m) * m


def _build_toeplitz(weight_oihw, bias, *, Wpad, Wo, Kp):
    """Stacked row-Toeplitz weight matrix with folded bias, K-padded to Kp.

    T[(kh*Wpad + wk)*Cin + ci, wo*Cout + co] = w[co, ci, kh, wk - wo]
        if 0 <= wk - wo < KW else 0
    T[KH*Wpad*Cin, wo*Cout + co] = bias[co]        (matches the 'ones' lane)
    remaining rows up to Kp are zero, so
        out_row = lhs_row @ T  ==  conv2d + bias  for that output row.
    """
    w_hwio = jnp.transpose(weight_oihw, (2, 3, 1, 0))     # (KH, KW, Cin, Cout)
    KH, KW, Cin, Cout = w_hwio.shape
    wk = jnp.arange(Wpad)[:, None]                         # (Wpad, 1)
    wo = jnp.arange(Wo)[None, :]                           # (1, Wo)
    kw_idx = wk - wo                                       # (Wpad, Wo)
    valid = (kw_idx >= 0) & (kw_idx < KW)
    kw_safe = jnp.clip(kw_idx, 0, KW - 1)
    t = w_hwio[:, kw_safe, :, :]                           # (KH, Wpad, Wo, Cin, Cout)
    t = jnp.where(valid[None, :, :, None, None], t, jnp.zeros((), t.dtype))
    t = jnp.transpose(t, (0, 1, 3, 2, 4))                  # (KH, Wpad, Cin, Wo, Cout)
    t = t.reshape(KH * Wpad * Cin, Wo * Cout)
    bias_row = jnp.tile(bias, (Wo,)).reshape(1, Wo * Cout)  # bias[co] at wo*Cout+co
    pad_rows = Kp - (KH * Wpad * Cin) - 1
    zeros = jnp.zeros((pad_rows, Wo * Cout), t.dtype)
    return jnp.concatenate([t, bias_row, zeros], axis=0)    # (Kp, Wo*Cout)


def make_conv_module(weight_oihw, bias, *, input_hw, padding=1):
    """Build a jitted forward for ConvModule: ReLU(Conv2d(x, W, b)).

    Weight-side glue runs once here; each forward only runs the (fused)
    activation glue + one single-step pallas_call.
    Assumes stride=1, dilation=1, groups=1, norm=None (the lgpma config).
    """
    Cout, Cin, KH, KW = weight_oihw.shape
    H, W = input_hw
    Hpad, Wpad = H + 2 * padding, W + 2 * padding
    Ho, Wo = Hpad - KH + 1, Wpad - KW + 1
    Keff = KH * Wpad * Cin                      # stacked-tap contraction (216)
    Kp = _round_up(Keff + 1, 128)               # +1 bias lane -> 256
    No = Wo * Cout                              # 128, lane-dense

    t_full = jax.device_put(
        _build_toeplitz(weight_oihw, bias, Wpad=Wpad, Wo=Wo, Kp=Kp))

    @jax.jit
    def forward(x_nchw):
        N = x_nchw.shape[0]
        M = N * Ho
        Mp = _round_up(M, 8)

        # Activation-side glue (fused by XLA with the pallas_call under jit):
        # NCHW -> NHWC, zero-pad, fold (W, Cin) onto lanes, stack the KH
        # kernel-row taps along the contraction dim (im2col over rows).
        x_nhwc = jnp.transpose(x_nchw, (0, 2, 3, 1))
        x_pad = jnp.pad(
            x_nhwc, ((0, 0), (padding, padding), (padding, padding), (0, 0)))
        x_rows = x_pad.reshape(N, Hpad, Wpad * Cin)
        taps = [x_rows[:, kh:kh + Ho, :] for kh in range(KH)]
        lhs = jnp.concatenate(taps, axis=-1).reshape(M, Keff)
        ones = jnp.ones((M, 1), lhs.dtype)                     # bias lane
        lhs = jnp.concatenate(
            [lhs, ones, jnp.zeros((M, Kp - Keff - 1), lhs.dtype)], axis=-1)
        if Mp != M:
            lhs = jnp.pad(lhs, ((0, Mp - M), (0, 0)))

        out_rows = pl.pallas_call(
            conv_bias_relu_kernel,
            out_shape=jax.ShapeDtypeStruct((Mp, No), x_nchw.dtype),
            grid=(1,),
            in_specs=[
                pl.BlockSpec((Mp, Kp), lambda i: (0, 0)),
                pl.BlockSpec((Kp, No), lambda i: (0, 0)),
            ],
            out_specs=pl.BlockSpec((Mp, No), lambda i: (0, 0)),
            compiler_params=pltpu.CompilerParams(
                dimension_semantics=("arbitrary",)),
        )(lhs, t_full)

        out_nhwc = out_rows[:M].reshape(N, Ho, Wo, Cout)
        # TODO(synk): drop this NCHW transpose if the consumer accepts NHWC.
        return jnp.transpose(out_nhwc, (0, 3, 1, 2))

    return forward


if __name__ == "__main__":
    key = jax.random.PRNGKey(0)
    kx, kw, kb = jax.random.split(key, 3)

    N, Cin, Cout, H, W, K, pad = 2, 4, 8, 16, 16, 3, 1

    x = jax.random.normal(kx, (N, Cin, H, W), dtype=jnp.float32)

    # PyTorch Conv2d-style parameters (OIHW weight, (Cout,) bias), default
    # uniform(-1/sqrt(fan_in), 1/sqrt(fan_in)) init range.
    fan_in = Cin * K * K
    bound = 1.0 / (fan_in ** 0.5)
    w = jax.random.uniform(kw, (Cout, Cin, K, K), jnp.float32, -bound, bound)
    b = jax.random.uniform(kb, (Cout,), jnp.float32, -bound, bound)

    forward = make_conv_module(w, b, input_hw=(H, W), padding=pad)
    out = jax.block_until_ready(forward(x))

    # Reference: same semantics as nn.Conv2d(padding=1) + bias + ReLU.
    ref = jax.lax.conv_general_dilated(
        x, w, window_strides=(1, 1), padding=((pad, pad), (pad, pad)),
        dimension_numbers=("NCHW", "OIHW", "NCHW"))
    ref = jnp.maximum(ref + b[None, :, None, None], 0.0)

    assert out.shape == (N, Cout, H, W)
    assert jnp.allclose(out, ref, atol=5e-4, rtol=5e-4)
    print("KERNEL_OK")
</pallas_src>

<mosaic_0001>
module attributes {stable_mosaic.version = 11 : i64} {
  func.func @conv_bias_relu_kernel(%arg0: i32, %arg1: memref<32x256xf32, #tpu.memory_space<vmem>>, %arg2: memref<256x128xf32, #tpu.memory_space<vmem>>, %arg3: memref<32x128xf32, #tpu.memory_space<vmem>>) attributes {dimension_semantics = [#tpu.dimension_semantics<arbitrary>], iteration_bounds = array<i64: 1>, scalar_prefetch = 0 : i64, scratch_operands = 0 : i64, tpu.core_type = #tpu.core_type<tc>, window_params = [{pipeline_mode = #tpu.pipeline_mode<synchronous>, transform_indices = @transform_0, window_bounds = array<i64: 32, 256>}, {pipeline_mode = #tpu.pipeline_mode<synchronous>, transform_indices = @transform_1, window_bounds = array<i64: 256, 128>}, {pipeline_mode = #tpu.pipeline_mode<synchronous>, transform_indices = @transform_2, window_bounds = array<i64: 32, 128>}]} {
    %c0 = arith.constant 0 : index
    %c0_0 = arith.constant 0 : index
    %0 = vector.load %arg1[%c0, %c0_0] : memref<32x256xf32, #tpu.memory_space<vmem>>, vector<32x256xf32>
    %c0_1 = arith.constant 0 : index
    %c0_2 = arith.constant 0 : index
    %1 = vector.load %arg2[%c0_1, %c0_2] : memref<256x128xf32, #tpu.memory_space<vmem>>, vector<256x128xf32>
    %cst = arith.constant dense<0.000000e+00> : vector<32x128xf32>
    %2 = tpu.matmul %0, %1, %cst {dimension_numbers = #tpu.dot_dimension_numbers<[1], [0], [0], [1], [0, 0, 1, 1], [], []>} : vector<32x256xf32>, vector<256x128xf32>, vector<32x128xf32> -> vector<32x128xf32>
    %cst_3 = arith.constant 0.000000e+00 : f32
    %3 = vector.broadcast %cst_3 : f32 to vector<32x128xf32>
    %4 = arith.maximumf %2, %3 : vector<32x128xf32>
    %c0_4 = arith.constant 0 : index
    %c0_5 = arith.constant 0 : index
    %5 = vector.load %arg3[%c0_4, %c0_5] : memref<32x128xf32, #tpu.memory_space<vmem>>, vector<32x128xf32>
    tpu.vector_store %arg3[%c0_4, %c0_5], %4 {strides = array<i32>} : memref<32x128xf32, #tpu.memory_space<vmem>>, vector<32x128xf32>,
    return
  }
  func.func @transform_0(%arg0: i32) -> (i32, i32) {
    %c0_i32 = arith.constant 0 : i32
    %c0_i32_0 = arith.constant 0 : i32
    %c0_i32_1 = arith.constant 0 : i32
    return %c0_i32, %c0_i32_0 : i32, i32
  }
  func.func @transform_1(%arg0: i32) -> (i32, i32) {
    %c0_i32 = arith.constant 0 : i32
    %c0_i32_0 = arith.constant 0 : i32
    %c0_i32_1 = arith.constant 0 : i32
    return %c0_i32, %c0_i32_0 : i32, i32
  }
  func.func @transform_2(%arg0: i32) -> (i32, i32) {
    %c0_i32 = arith.constant 0 : i32
    %c0_i32_0 = arith.constant 0 : i32
    %c0_i32_1 = arith.constant 0 : i32
    return %c0_i32, %c0_i32_0 : i32, i32
  }
}

</mosaic_0001>

<llo_original>
// kernel: forward.1
$region0: #{forward.1}
  #allocation0 [shape = 'u32[]', space=smem, size = 0x4, offset = 0x4, fixed_abs, tag = 'smem constant byte address 0x4 - core index']
  #allocation1 [shape = 'u32[72,128]{1,0:T(1,128)}', space=vmem, size = 0x9000, scoped, tag = 'internal scratch']
  %s0 = inlined_call_operand.vmem [shape: f32[32,256], index: 0, kind: input, shape index: {}]
  %s1 = inlined_call_operand.vmem [shape: f32[256,128], index: 1, kind: input, shape index: {}]
  %s2 = inlined_call_operand.vmem [shape: f32[32,128], index: 2, kind: output, shape index: {}]
  %s3 = sld [smem:[#allocation0]]
  $region18: #{forward.1} parent=0
    _
  %s5 = ssub.s32 1, %s3
  %s6 = scalar_select 0, %s5, %s3
  // Predicated region
  $region2: #{forward.1} parent=0 // pred_check
    _
  $region3: #{forward.1} parent=0 // pred_check_branch
    %8 = sbr.rel (0) target = $region5
  $region4: #{forward.1} parent=0 // pred_region
    _
  $region5: #{forward.1} parent=0 // pred_fallthru
    _
  // Predicated region
  $region6: #{forward.1} parent=0 // pred_check
    _
  $region7: #{forward.1} parent=0 // pred_check_branch
    %10 = sbr.rel (0) target = $region9
  $region8: #{forward.1} parent=0 // pred_region
    _
  $region9: #{forward.1} parent=0 // pred_fallthru
    _
  %v11 = vld [vmem:[%s0] sm:$0xff]
  %v12 = vld [vmem:[%s0 + $0x8] sm:$0xff]
  %v13 = vld [vmem:[%s0 + $0x10] sm:$0xff]
  %v14 = vld [vmem:[%s0 + $0x18] sm:$0xff]
  %v15 = vld [vmem:[%s0 + $0x20] sm:$0xff]
  %v16 = vld [vmem:[%s0 + $0x28] sm:$0xff]
  %v17 = vld [vmem:[%s0 + $0x30] sm:$0xff]
  %v18 = vld [vmem:[%s0 + $0x38] sm:$0xff]
  %v19 = vld [vmem:[%s1] sm:$0xff]
  %v20 = vld [vmem:[%s1 + $0x8] sm:$0xff]
  %v21 = vld [vmem:[%s1 + $0x10] sm:$0xff]
  %v22 = vld [vmem:[%s1 + $0x18] sm:$0xff]
  %v23 = vld [vmem:[%s1 + $0x20] sm:$0xff]
  %v24 = vld [vmem:[%s1 + $0x28] sm:$0xff]
  %v25 = vld [vmem:[%s1 + $0x30] sm:$0xff]
  %v26 = vld [vmem:[%s1 + $0x38] sm:$0xff]
  %v27 = vld [vmem:[%s1 + $0x40] sm:$0xff]
  %v28 = vld [vmem:[%s1 + $0x48] sm:$0xff]
  %v29 = vld [vmem:[%s1 + $0x50] sm:$0xff]
  %v30 = vld [vmem:[%s1 + $0x58] sm:$0xff]
  %v31 = vld [vmem:[%s1 + $0x60] sm:$0xff]
  %v32 = vld [vmem:[%s1 + $0x68] sm:$0xff]
  %v33 = vld [vmem:[%s1 + $0x70] sm:$0xff]
  %v34 = vld [vmem:[%s1 + $0x78] sm:$0xff]
  %v35 = vld [vmem:[%s1 + $0x80] sm:$0xff]
  %v36 = vld [vmem:[%s1 + $0x88] sm:$0xff]
  %v37 = vld [vmem:[%s1 + $0x90] sm:$0xff]
  %v38 = vld [vmem:[%s1 + $0x98] sm:$0xff]
  %v39 = vld [vmem:[%s1 + $0xa0] sm:$0xff]
  %v40 = vld [vmem:[%s1 + $0xa8] sm:$0xff]
  %v41 = vld [vmem:[%s1 + $0xb0] sm:$0xff]
  %v42 = vld [vmem:[%s1 + $0xb8] sm:$0xff]
  %v43 = vld [vmem:[%s1 + $0xc0] sm:$0xff]
  %v44 = vld [vmem:[%s1 + $0xc8] sm:$0xff]
  %v45 = vld [vmem:[%s1 + $0xd0] sm:$0xff]
  %v46 = vld [vmem:[%s1 + $0xd8] sm:$0xff]
  %v47 = vld [vmem:[%s1 + $0xe0] sm:$0xff]
  %v48 = vld [vmem:[%s1 + $0xe8] sm:$0xff]
  %v49 = vld [vmem:[%s1 + $0xf0] sm:$0xff]
  %v50 = vld [vmem:[%s1 + $0xf8] sm:$0xff]
  %51 = vmatpush.msra.mxu0 %v34
  %52 = vmatpush.msra.mxu0 %v33
  %53 = vmatpush.msra.mxu0 %v32
  %54 = vmatpush.msra.mxu0 %v31
  %55 = vmatpush.msra.mxu0 %v30
  %56 = vmatpush.msra.mxu0 %v29
  %57 = vmatpush.msra.mxu0 %v28
  %58 = vmatpush.msra.mxu0 %v27
  %59 = vmatpush.msra.mxu0 %v26
  %60 = vmatpush.msra.mxu0 %v25
  %61 = vmatpush.msra.mxu0 %v24
  %62 = vmatpush.msra.mxu0 %v23
  %63 = vmatpush.msra.mxu0 %v22
  %64 = vmatpush.msra.mxu0 %v21
  %65 = vmatpush.msra.mxu0 %v20
  %66 = vmatpush.msra.mxu0 %v19
  %67 = vmatmul.f32.gmra.mxu0 %v11
  %v68 = vpop.f32.mrf.mxu0
  %v69 = vadd.f32 0.0, %v68
  %70 = vmatmul.f32.gmra.mxu0 %v13
  %v71 = vpop.f32.mrf.mxu0
  %v72 = vadd.f32 0.0, %v71
  %73 = vmatmul.f32.gmra.mxu0 %v15
  %v74 = vpop.f32.mrf.mxu0
  %v75 = vadd.f32 0.0, %v74
  %76 = vmatmul.f32.gmra.mxu0 %v17
  %v77 = vpop.f32.mrf.mxu0
  %v78 = vadd.f32 0.0, %v77
  %79 = vdwg.mxu0
  %80 = vmatpush.msra.mxu0 %v50
  %81 = vmatpush.msra.mxu0 %v49
  %82 = vmatpush.msra.mxu0 %v48
  %83 = vmatpush.msra.mxu0 %v47
  %84 = vmatpush.msra.mxu0 %v46
  %85 = vmatpush.msra.mxu0 %v45
  %86 = vmatpush.msra.mxu0 %v44
  %87 = vmatpush.msra.mxu0 %v43
  %88 = vmatpush.msra.mxu0 %v42
  %89 = vmatpush.msra.mxu0 %v41
  %90 = vmatpush.msra.mxu0 %v40
  %91 = vmatpush.msra.mxu0 %v39
  %92 = vmatpush.msra.mxu0 %v38
  %93 = vmatpush.msra.mxu0 %v37
  %94 = vmatpush.msra.mxu0 %v36
  %95 = vmatpush.msra.mxu0 %v35
  %96 = vmatmul.f32.gmra.mxu0 %v12
  %v97 = vpop.f32.mrf.mxu0
  %v98 = vadd.f32 %v69, %v97
  %99 = vmatmul.f32.gmra.mxu0 %v14
  %v100 = vpop.f32.mrf.mxu0
  %v101 = vadd.f32 %v72, %v100
  %102 = vmatmul.f32.gmra.mxu0 %v16
  %v103 = vpop.f32.mrf.mxu0
  %v104 = vadd.f32 %v75, %v103
  %105 = vmatmul.f32.gmra.mxu0 %v18
  %v106 = vpop.f32.mrf.mxu0
  %v107 = vadd.f32 %v78, %v106
  %108 = vdwg.mxu0
  %v109 = vmax.f32 %v98, 0.0
  %v110 = vmax.f32 %v101, 0.0
  %v111 = vmax.f32 %v104, 0.0
  %v112 = vmax.f32 %v107, 0.0
  %113 = vst [vmem:[%s2] sm:$0xff] %v109
  %114 = vst [vmem:[%s2 + $0x8] sm:$0xff] %v110
  %115 = vst [vmem:[%s2 + $0x10] sm:$0xff] %v111
  %116 = vst [vmem:[%s2 + $0x18] sm:$0xff] %v112
  // Predicated region
  $region10: #{forward.1} parent=0 // pred_check
    _
  $region11: #{forward.1} parent=0 // pred_check_branch
    %118 = sbr.rel (0) target = $region13
  $region12: #{forward.1} parent=0 // pred_region
    _
  $region13: #{forward.1} parent=0 // pred_fallthru
    _
  // Predicated region
  $region14: #{forward.1} parent=0 // pred_check
    _
  $region15: #{forward.1} parent=0 // pred_check_branch
    %120 = sbr.rel (0) target = $region17
  $region16: #{forward.1} parent=0 // pred_region
    _
  $region17: #{forward.1} parent=0 // pred_fallthru
    _

</llo_original>
